<compile_context>
chip_gen: v6e
topology: v6e:2x2x1
jax: 0.10.0
libtpu: 0.0.40
codegen_flags: <defaults>
</compile_context>

<pallas_src>
import functools
from math import sqrt

import jax
import jax.numpy as jnp
from jax.experimental import pallas as pl
from jax.experimental.pallas import tpu as pltpu


def _lstm_fc_kernel(x_ref, wih_ref, whh_ref, b_ref, wfc_ref, bfc_ref,
                    out_ref, gates_scr, *, seq_len, batch_pad, hidden_size):
    """Whole-sequence LSTM forward + fused final Linear.

    x_ref     : (T, BP, I)   f32   full sequence, VMEM resident
    wih_ref   : (I, 4H)      f32   W_ih^T
    whh_ref   : (H, 4H)      f32   W_hh^T
    b_ref     : (1, 4H)      f32   b_ih + b_hh
    wfc_ref   : (H, OP)      f32   W_fc^T, zero-padded to OP lanes
    bfc_ref   : (1, OP)      f32   b_fc, zero-padded to OP lanes
    out_ref   : (BP, OP)     f32   lane-dense output slab
    gates_scr : (T, BP, 4H)  f32   VMEM scratch: pre-projected input gates
    """
    T, BP, H = seq_len, batch_pad, hidden_size
    in_size = x_ref.shape[-1]

    # ---- Phase 1: hoisted input projection — one big MXU matmul ------------
    x_2d = x_ref[...].reshape(T * BP, in_size)                    # (T*BP, I)
    gates_in = (jnp.dot(x_2d, wih_ref[...],
                        preferred_element_type=jnp.float32)
                + b_ref[...])                                     # (T*BP, 4H)
    gates_scr[...] = gates_in.reshape(T, BP, 4 * H)

    # ---- Phase 2: sequential recurrence; (h, c) carried in vregs -----------
    whh = whh_ref[...]                                            # (H, 4H)

    def step(t, carry):
        h_prev, c_prev = carry
        g = gates_scr[t] + jnp.dot(h_prev, whh,
                                   preferred_element_type=jnp.float32)  # (BP, 4H)
        # Full-vreg transcendentals, sliced afterwards (PyTorch order i,f,g,o).
        sig = jax.nn.sigmoid(g)
        tah = jnp.tanh(g)
        i_g = sig[:, 0 * H:1 * H]
        f_g = sig[:, 1 * H:2 * H]
        g_g = tah[:, 2 * H:3 * H]
        o_g = sig[:, 3 * H:4 * H]
        c_new = f_g * c_prev + i_g * g_g
        h_new = o_g * jnp.tanh(c_new)
        return h_new, c_new

    h0 = jnp.zeros((BP, H), jnp.float32)
    c0 = jnp.zeros((BP, H), jnp.float32)
    h_fin, _ = jax.lax.fori_loop(0, T, step, (h0, c0), unroll=True)

    # ---- Phase 3: fused final Linear, lane-dense store ----------------------
    out_ref[...] = (
        jnp.dot(h_fin, wfc_ref[...], preferred_element_type=jnp.float32)
        + bfc_ref[...]
    ).astype(out_ref.dtype)


def _round_up(n, m):
    return ((n + m - 1) // m) * m


def rnn_model_forward(x, params):
    """x: (B, T, input_size) float32.  Returns (B, output_size)."""
    w_ih, w_hh, b_ih, b_hh, w_fc, b_fc = (
        params["w_ih"], params["w_hh"], params["b_ih"], params["b_hh"],
        params["w_fc"], params["b_fc"],
    )
    B, T, I = x.shape
    H = w_hh.shape[1]
    O = w_fc.shape[0]

    BP = max(8, _round_up(B, 8))        # sublane-pad the batch (f32: 8 rows)
    OP = max(128, _round_up(O, 128))    # lane-dense output slab

    # Activation-major weights; fused LSTM biases; zero-padded fc weight/bias.
    wih_t = jnp.transpose(w_ih).astype(jnp.float32)               # (I, 4H)
    whh_t = jnp.transpose(w_hh).astype(jnp.float32)               # (H, 4H)
    bias = (b_ih + b_hh).reshape(1, 4 * H).astype(jnp.float32)    # (1, 4H)
    wfc_t = jnp.zeros((H, OP), jnp.float32).at[:, :O].set(jnp.transpose(w_fc))
    bfc = jnp.zeros((1, OP), jnp.float32).at[:, :O].set(b_fc.reshape(1, O))

    # (B, T, I) -> (T, BP, I), batch zero-padded.  At production sizes this
    # transpose would be folded into a wrapper-side projection GEMM
    # ('bti,ih->tbh'); at these shapes it is negligible and keeps the whole
    # projection on the kernel's MXU.
    x_tbi = jnp.transpose(x.astype(jnp.float32), (1, 0, 2))
    if BP != B:
        x_tbi = jnp.pad(x_tbi, ((0, 0), (0, BP - B), (0, 0)))

    kernel = functools.partial(_lstm_fc_kernel, seq_len=T, batch_pad=BP,
                               hidden_size=H)

    # Single invocation, no grid: everything (x, weights, gate scratch) is
    # VMEM resident — a few hundred KiB at these shapes, far under any
    # v5e/v6e/v7x scoped-VMEM limit.
    # NOTE(v6e scale-up): for large H, cast wih_t/whh_t (and the pre-projected
    # gates) to bf16 for the MXU while keeping f32 accumulation and f32 gate
    # math; kept f32 here so the result tracks the f32 reference tightly.
    out_pad = pl.pallas_call(
        kernel,
        out_shape=jax.ShapeDtypeStruct((BP, OP), jnp.float32),
        in_specs=[pl.BlockSpec(memory_space=pltpu.MemorySpace.VMEM)] * 6,
        out_specs=pl.BlockSpec(memory_space=pltpu.MemorySpace.VMEM),
        scratch_shapes=[pltpu.VMEM((T, BP, 4 * H), jnp.float32)],
    )(x_tbi, wih_t, whh_t, bias, wfc_t, bfc)

    return out_pad[:B, :O].astype(x.dtype)


def _reference_forward(x, params):
    """Pure-JAX reference of PyTorch LSTM(batch_first) + Linear on last step."""
    w_ih, w_hh, b_ih, b_hh, w_fc, b_fc = (
        params["w_ih"], params["w_hh"], params["b_ih"], params["b_hh"],
        params["w_fc"], params["b_fc"],
    )
    B, T, I = x.shape
    H = w_hh.shape[1]
    h = jnp.zeros((B, H), jnp.float32)
    c = jnp.zeros((B, H), jnp.float32)

    def step(carry, x_t):
        h, c = carry
        gates = x_t @ w_ih.T + h @ w_hh.T + b_ih + b_hh
        i = jax.nn.sigmoid(gates[:, 0 * H:1 * H])
        f = jax.nn.sigmoid(gates[:, 1 * H:2 * H])
        g = jnp.tanh(gates[:, 2 * H:3 * H])
        o = jax.nn.sigmoid(gates[:, 3 * H:4 * H])
        c = f * c + i * g
        h = o * jnp.tanh(c)
        return (h, c), None

    (h, c), _ = jax.lax.scan(step, (h, c), jnp.transpose(x, (1, 0, 2)))
    return h @ w_fc.T + b_fc


def init_params(key, input_size, hidden_size, output_size):
    """Deterministic init mirroring PyTorch's uniform(-1/sqrt(H), 1/sqrt(H))."""
    ks = jax.random.split(key, 6)
    k_lstm = 1.0 / sqrt(hidden_size)
    k_fc = 1.0 / sqrt(hidden_size)
    u = lambda k, shape, lim: jax.random.uniform(
        k, shape, jnp.float32, minval=-lim, maxval=lim)
    return {
        "w_ih": u(ks[0], (4 * hidden_size, input_size), k_lstm),
        "w_hh": u(ks[1], (4 * hidden_size, hidden_size), k_lstm),
        "b_ih": u(ks[2], (4 * hidden_size,), k_lstm),
        "b_hh": u(ks[3], (4 * hidden_size,), k_lstm),
        "w_fc": u(ks[4], (output_size, hidden_size), k_fc),
        "b_fc": u(ks[5], (output_size,), k_fc),
    }


if __name__ == "__main__":
    B, T, INPUT, HIDDEN, OUT = 4, 8, 8, 32, 4

    key = jax.random.PRNGKey(0)
    k_x, k_p = jax.random.split(key)
    x = jax.random.normal(k_x, (B, T, INPUT), jnp.float32)
    params = init_params(k_p, INPUT, HIDDEN, OUT)

    fwd = jax.jit(rnn_model_forward)
    out = jax.block_until_ready(fwd(x, params))

    ref = jax.block_until_ready(_reference_forward(x, params))
    assert out.shape == (B, OUT)
    assert jnp.allclose(out, ref, atol=1e-4, rtol=1e-4), (
        f"mismatch: max abs err {jnp.max(jnp.abs(out - ref))}")

    print("KERNEL_OK")
</pallas_src>

<mosaic_0001>
module attributes {stable_mosaic.version = 11 : i64} {
  func.func @_lstm_fc_kernel(%arg0: memref<8x8x8xf32, #tpu.memory_space<vmem>>, %arg1: memref<8x128xf32, #tpu.memory_space<vmem>>, %arg2: memref<32x128xf32, #tpu.memory_space<vmem>>, %arg3: memref<1x128xf32, #tpu.memory_space<vmem>>, %arg4: memref<32x128xf32, #tpu.memory_space<vmem>>, %arg5: memref<1x128xf32, #tpu.memory_space<vmem>>, %arg6: memref<8x128xf32, #tpu.memory_space<vmem>>, %arg7: memref<8x8x128xf32, #tpu.memory_space<vmem>>) attributes {dimension_semantics = [], scalar_prefetch = 0 : i64, scratch_operands = 1 : i64, tpu.core_type = #tpu.core_type<tc>} {
    %c0 = arith.constant 0 : index
    %c0_0 = arith.constant 0 : index
    %c0_1 = arith.constant 0 : index
    %0 = vector.load %arg0[%c0, %c0_0, %c0_1] : memref<8x8x8xf32, #tpu.memory_space<vmem>>, vector<8x8x8xf32>
    %1 = vector.shape_cast %0 : vector<8x8x8xf32> to vector<64x8xf32>
    %c0_2 = arith.constant 0 : index
    %c0_3 = arith.constant 0 : index
    %2 = vector.load %arg1[%c0_2, %c0_3] : memref<8x128xf32, #tpu.memory_space<vmem>>, vector<8x128xf32>
    %cst = arith.constant dense<0.000000e+00> : vector<64x128xf32>
    %3 = tpu.matmul %1, %2, %cst {dimension_numbers = #tpu.dot_dimension_numbers<[1], [0], [0], [1], [0, 0, 1, 1], [], []>} : vector<64x8xf32>, vector<8x128xf32>, vector<64x128xf32> -> vector<64x128xf32>
    %c0_4 = arith.constant 0 : index
    %c0_5 = arith.constant 0 : index
    %4 = vector.load %arg3[%c0_4, %c0_5] : memref<1x128xf32, #tpu.memory_space<vmem>>, vector<1x128xf32>
    %5 = vector.broadcast %4 : vector<1x128xf32> to vector<64x128xf32>
    %6 = arith.addf %3, %5 : vector<64x128xf32>
    %7 = vector.shape_cast %6 : vector<64x128xf32> to vector<8x8x128xf32>
    %c0_6 = arith.constant 0 : index
    %c0_7 = arith.constant 0 : index
    %c0_8 = arith.constant 0 : index
    %8 = vector.load %arg7[%c0_6, %c0_7, %c0_8] : memref<8x8x128xf32, #tpu.memory_space<vmem>>, vector<8x8x128xf32>
    tpu.vector_store %arg7[%c0_6, %c0_7, %c0_8], %7 {strides = array<i32>} : memref<8x8x128xf32, #tpu.memory_space<vmem>>, vector<8x8x128xf32>,
    %c0_9 = arith.constant 0 : index
    %c0_10 = arith.constant 0 : index
    %9 = vector.load %arg2[%c0_9, %c0_10] : memref<32x128xf32, #tpu.memory_space<vmem>>, vector<32x128xf32>
    %cst_11 = arith.constant 0.000000e+00 : f32
    %10 = vector.broadcast %cst_11 : f32 to vector<8x32xf32>
    %cst_12 = arith.constant 0.000000e+00 : f32
    %11 = vector.broadcast %cst_12 : f32 to vector<8x32xf32>
    %c0_i32 = arith.constant 0 : i32
    %12 = arith.index_cast %c0_i32 : i32 to index
    %c0_13 = arith.constant 0 : index
    %c0_14 = arith.constant 0 : index
    %13 = vector.load %arg7[%12, %c0_13, %c0_14] : memref<8x8x128xf32, #tpu.memory_space<vmem>>, vector<1x8x128xf32>
    %14 = vector.shape_cast %13 : vector<1x8x128xf32> to vector<8x128xf32>
    %cst_15 = arith.constant dense<0.000000e+00> : vector<8x128xf32>
    %15 = tpu.matmul %10, %9, %cst_15 {dimension_numbers = #tpu.dot_dimension_numbers<[1], [0], [0], [1], [0, 0, 1, 1], [], []>} : vector<8x32xf32>, vector<32x128xf32>, vector<8x128xf32> -> vector<8x128xf32>
    %16 = arith.addf %14, %15 : vector<8x128xf32>
    %17 = arith.negf %16 : vector<8x128xf32>
    %18 = math.exp %17 : vector<8x128xf32>
    %cst_16 = arith.constant 1.000000e+00 : f32
    %19 = vector.broadcast %cst_16 : f32 to vector<8x128xf32>
    %20 = arith.addf %19, %18 : vector<8x128xf32>
    %21 = arith.divf %19, %20 : vector<8x128xf32>
    %22 = math.tanh %16 : vector<8x128xf32>
    %23 = vector.extract_strided_slice %21 {offsets = [0, 0], sizes = [8, 32], strides = [1, 1]} : vector<8x128xf32> to vector<8x32xf32>
    %24 = vector.extract_strided_slice %21 {offsets = [0, 32], sizes = [8, 32], strides = [1, 1]} : vector<8x128xf32> to vector<8x32xf32>
    %25 = vector.extract_strided_slice %22 {offsets = [0, 64], sizes = [8, 32], strides = [1, 1]} : vector<8x128xf32> to vector<8x32xf32>
    %26 = vector.extract_strided_slice %21 {offsets = [0, 96], sizes = [8, 32], strides = [1, 1]} : vector<8x128xf32> to vector<8x32xf32>
    %27 = arith.mulf %24, %11 : vector<8x32xf32>
    %28 = arith.mulf %23, %25 : vector<8x32xf32>
    %29 = arith.addf %27, %28 : vector<8x32xf32>
    %30 = math.tanh %29 : vector<8x32xf32>
    %31 = arith.mulf %26, %30 : vector<8x32xf32>
    %c1_i32 = arith.constant 1 : i32
    %32 = arith.index_cast %c1_i32 : i32 to index
    %c0_17 = arith.constant 0 : index
    %c0_18 = arith.constant 0 : index
    %33 = vector.load %arg7[%32, %c0_17, %c0_18] : memref<8x8x128xf32, #tpu.memory_space<vmem>>, vector<1x8x128xf32>
    %34 = vector.shape_cast %33 : vector<1x8x128xf32> to vector<8x128xf32>
    %cst_19 = arith.constant dense<0.000000e+00> : vector<8x128xf32>
    %35 = tpu.matmul %31, %9, %cst_19 {dimension_numbers = #tpu.dot_dimension_numbers<[1], [0], [0], [1], [0, 0, 1, 1], [], []>} : vector<8x32xf32>, vector<32x128xf32>, vector<8x128xf32> -> vector<8x128xf32>
    %36 = arith.addf %34, %35 : vector<8x128xf32>
    %37 = arith.negf %36 : vector<8x128xf32>
    %38 = math.exp %37 : vector<8x128xf32>
    %cst_20 = arith.constant 1.000000e+00 : f32
    %39 = vector.broadcast %cst_20 : f32 to vector<8x128xf32>
    %40 = arith.addf %39, %38 : vector<8x128xf32>
    %41 = arith.divf %39, %40 : vector<8x128xf32>
    %42 = math.tanh %36 : vector<8x128xf32>
    %43 = vector.extract_strided_slice %41 {offsets = [0, 0], sizes = [8, 32], strides = [1, 1]} : vector<8x128xf32> to vector<8x32xf32>
    %44 = vector.extract_strided_slice %41 {offsets = [0, 32], sizes = [8, 32], strides = [1, 1]} : vector<8x128xf32> to vector<8x32xf32>
    %45 = vector.extract_strided_slice %42 {offsets = [0, 64], sizes = [8, 32], strides = [1, 1]} : vector<8x128xf32> to vector<8x32xf32>
    %46 = vector.extract_strided_slice %41 {offsets = [0, 96], sizes = [8, 32], strides = [1, 1]} : vector<8x128xf32> to vector<8x32xf32>
    %47 = arith.mulf %44, %29 : vector<8x32xf32>
    %48 = arith.mulf %43, %45 : vector<8x32xf32>
    %49 = arith.addf %47, %48 : vector<8x32xf32>
    %50 = math.tanh %49 : vector<8x32xf32>
    %51 = arith.mulf %46, %50 : vector<8x32xf32>
    %c2_i32 = arith.constant 2 : i32
    %52 = arith.index_cast %c2_i32 : i32 to index
    %c0_21 = arith.constant 0 : index
    %c0_22 = arith.constant 0 : index
    %53 = vector.load %arg7[%52, %c0_21, %c0_22] : memref<8x8x128xf32, #tpu.memory_space<vmem>>, vector<1x8x128xf32>
    %54 = vector.shape_cast %53 : vector<1x8x128xf32> to vector<8x128xf32>
    %cst_23 = arith.constant dense<0.000000e+00> : vector<8x128xf32>
    %55 = tpu.matmul %51, %9, %cst_23 {dimension_numbers = #tpu.dot_dimension_numbers<[1], [0], [0], [1], [0, 0, 1, 1], [], []>} : vector<8x32xf32>, vector<32x128xf32>, vector<8x128xf32> -> vector<8x128xf32>
    %56 = arith.addf %54, %55 : vector<8x128xf32>
    %57 = arith.negf %56 : vector<8x128xf32>
    %58 = math.exp %57 : vector<8x128xf32>
    %cst_24 = arith.constant 1.000000e+00 : f32
    %59 = vector.broadcast %cst_24 : f32 to vector<8x128xf32>
    %60 = arith.addf %59, %58 : vector<8x128xf32>
    %61 = arith.divf %59, %60 : vector<8x128xf32>
    %62 = math.tanh %56 : vector<8x128xf32>
    %63 = vector.extract_strided_slice %61 {offsets = [0, 0], sizes = [8, 32], strides = [1, 1]} : vector<8x128xf32> to vector<8x32xf32>
    %64 = vector.extract_strided_slice %61 {offsets = [0, 32], sizes = [8, 32], strides = [1, 1]} : vector<8x128xf32> to vector<8x32xf32>
    %65 = vector.extract_strided_slice %62 {offsets = [0, 64], sizes = [8, 32], strides = [1, 1]} : vector<8x128xf32> to vector<8x32xf32>
    %66 = vector.extract_strided_slice %61 {offsets = [0, 96], sizes = [8, 32], strides = [1, 1]} : vector<8x128xf32> to vector<8x32xf32>
    %67 = arith.mulf %64, %49 : vector<8x32xf32>
    %68 = arith.mulf %63, %65 : vector<8x32xf32>
    %69 = arith.addf %67, %68 : vector<8x32xf32>
    %70 = math.tanh %69 : vector<8x32xf32>
    %71 = arith.mulf %66, %70 : vector<8x32xf32>
    %c3_i32 = arith.constant 3 : i32
    %72 = arith.index_cast %c3_i32 : i32 to index
    %c0_25 = arith.constant 0 : index
    %c0_26 = arith.constant 0 : index
    %73 = vector.load %arg7[%72, %c0_25, %c0_26] : memref<8x8x128xf32, #tpu.memory_space<vmem>>, vector<1x8x128xf32>
    %74 = vector.shape_cast %73 : vector<1x8x128xf32> to vector<8x128xf32>
    %cst_27 = arith.constant dense<0.000000e+00> : vector<8x128xf32>
    %75 = tpu.matmul %71, %9, %cst_27 {dimension_numbers = #tpu.dot_dimension_numbers<[1], [0], [0], [1], [0, 0, 1, 1], [], []>} : vector<8x32xf32>, vector<32x128xf32>, vector<8x128xf32> -> vector<8x128xf32>
    %76 = arith.addf %74, %75 : vector<8x128xf32>
    %77 = arith.negf %76 : vector<8x128xf32>
    %78 = math.exp %77 : vector<8x128xf32>
    %cst_28 = arith.constant 1.000000e+00 : f32
    %79 = vector.broadcast %cst_28 : f32 to vector<8x128xf32>
    %80 = arith.addf %79, %78 : vector<8x128xf32>
    %81 = arith.divf %79, %80 : vector<8x128xf32>
    %82 = math.tanh %76 : vector<8x128xf32>
    %83 = vector.extract_strided_slice %81 {offsets = [0, 0], sizes = [8, 32], strides = [1, 1]} : vector<8x128xf32> to vector<8x32xf32>
    %84 = vector.extract_strided_slice %81 {offsets = [0, 32], sizes = [8, 32], strides = [1, 1]} : vector<8x128xf32> to vector<8x32xf32>
    %85 = vector.extract_strided_slice %82 {offsets = [0, 64], sizes = [8, 32], strides = [1, 1]} : vector<8x128xf32> to vector<8x32xf32>
    %86 = vector.extract_strided_slice %81 {offsets = [0, 96], sizes = [8, 32], strides = [1, 1]} : vector<8x128xf32> to vector<8x32xf32>
    %87 = arith.mulf %84, %69 : vector<8x32xf32>
    %88 = arith.mulf %83, %85 : vector<8x32xf32>
    %89 = arith.addf %87, %88 : vector<8x32xf32>
    %90 = math.tanh %89 : vector<8x32xf32>
    %91 = arith.mulf %86, %90 : vector<8x32xf32>
    %c4_i32 = arith.constant 4 : i32
    %92 = arith.index_cast %c4_i32 : i32 to index
    %c0_29 = arith.constant 0 : index
    %c0_30 = arith.constant 0 : index
    %93 = vector.load %arg7[%92, %c0_29, %c0_30] : memref<8x8x128xf32, #tpu.memory_space<vmem>>, vector<1x8x128xf32>
    %94 = vector.shape_cast %93 : vector<1x8x128xf32> to vector<8x128xf32>
    %cst_31 = arith.constant dense<0.000000e+00> : vector<8x128xf32>
    %95 = tpu.matmul %91, %9, %cst_31 {dimension_numbers = #tpu.dot_dimension_numbers<[1], [0], [0], [1], [0, 0, 1, 1], [], []>} : vector<8x32xf32>, vector<32x128xf32>, vector<8x128xf32> -> vector<8x128xf32>
    %96 = arith.addf %94, %95 : vector<8x128xf32>
    %97 = arith.negf %96 : vector<8x128xf32>
    %98 = math.exp %97 : vector<8x128xf32>
    %cst_32 = arith.constant 1.000000e+00 : f32
    %99 = vector.broadcast %cst_32 : f32 to vector<8x128xf32>
    %100 = arith.addf %99, %98 : vector<8x128xf32>
    %101 = arith.divf %99, %100 : vector<8x128xf32>
    %102 = math.tanh %96 : vector<8x128xf32>
    %103 = vector.extract_strided_slice %101 {offsets = [0, 0], sizes = [8, 32], strides = [1, 1]} : vector<8x128xf32> to vector<8x32xf32>
    %104 = vector.extract_strided_slice %101 {offsets = [0, 32], sizes = [8, 32], strides = [1, 1]} : vector<8x128xf32> to vector<8x32xf32>
    %105 = vector.extract_strided_slice %102 {offsets = [0, 64], sizes = [8, 32], strides = [1, 1]} : vector<8x128xf32> to vector<8x32xf32>
    %106 = vector.extract_strided_slice %101 {offsets = [0, 96], sizes = [8, 32], strides = [1, 1]} : vector<8x128xf32> to vector<8x32xf32>
    %107 = arith.mulf %104, %89 : vector<8x32xf32>
    %108 = arith.mulf %103, %105 : vector<8x32xf32>
    %109 = arith.addf %107, %108 : vector<8x32xf32>
    %110 = math.tanh %109 : vector<8x32xf32>
    %111 = arith.mulf %106, %110 : vector<8x32xf32>
    %c5_i32 = arith.constant 5 : i32
    %112 = arith.index_cast %c5_i32 : i32 to index
    %c0_33 = arith.constant 0 : index
    %c0_34 = arith.constant 0 : index
    %113 = vector.load %arg7[%112, %c0_33, %c0_34] : memref<8x8x128xf32, #tpu.memory_space<vmem>>, vector<1x8x128xf32>
    %114 = vector.shape_cast %113 : vector<1x8x128xf32> to vector<8x128xf32>
    %cst_35 = arith.constant dense<0.000000e+00> : vector<8x128xf32>
    %115 = tpu.matmul %111, %9, %cst_35 {dimension_numbers = #tpu.dot_dimension_numbers<[1], [0], [0], [1], [0, 0, 1, 1], [], []>} : vector<8x32xf32>, vector<32x128xf32>, vector<8x128xf32> -> vector<8x128xf32>
    %116 = arith.addf %114, %115 : vector<8x128xf32>
    %117 = arith.negf %116 : vector<8x128xf32>
    %118 = math.exp %117 : vector<8x128xf32>
    %cst_36 = arith.constant 1.000000e+00 : f32
    %119 = vector.broadcast %cst_36 : f32 to vector<8x128xf32>
    %120 = arith.addf %119, %118 : vector<8x128xf32>
    %121 = arith.divf %119, %120 : vector<8x128xf32>
    %122 = math.tanh %116 : vector<8x128xf32>
    %123 = vector.extract_strided_slice %121 {offsets = [0, 0], sizes = [8, 32], strides = [1, 1]} : vector<8x128xf32> to vector<8x32xf32>
    %124 = vector.extract_strided_slice %121 {offsets = [0, 32], sizes = [8, 32], strides = [1, 1]} : vector<8x128xf32> to vector<8x32xf32>
    %125 = vector.extract_strided_slice %122 {offsets = [0, 64], sizes = [8, 32], strides = [1, 1]} : vector<8x128xf32> to vector<8x32xf32>
    %126 = vector.extract_strided_slice %121 {offsets = [0, 96], sizes = [8, 32], strides = [1, 1]} : vector<8x128xf32> to vector<8x32xf32>
    %127 = arith.mulf %124, %109 : vector<8x32xf32>
    %128 = arith.mulf %123, %125 : vector<8x32xf32>
    %129 = arith.addf %127, %128 : vector<8x32xf32>
    %130 = math.tanh %129 : vector<8x32xf32>
    %131 = arith.mulf %126, %130 : vector<8x32xf32>
    %c6_i32 = arith.constant 6 : i32
    %132 = arith.index_cast %c6_i32 : i32 to index
    %c0_37 = arith.constant 0 : index
    %c0_38 = arith.constant 0 : index
    %133 = vector.load %arg7[%132, %c0_37, %c0_38] : memref<8x8x128xf32, #tpu.memory_space<vmem>>, vector<1x8x128xf32>
    %134 = vector.shape_cast %133 : vector<1x8x128xf32> to vector<8x128xf32>
    %cst_39 = arith.constant dense<0.000000e+00> : vector<8x128xf32>
    %135 = tpu.matmul %131, %9, %cst_39 {dimension_numbers = #tpu.dot_dimension_numbers<[1], [0], [0], [1], [0, 0, 1, 1], [], []>} : vector<8x32xf32>, vector<32x128xf32>, vector<8x128xf32> -> vector<8x128xf32>
    %136 = arith.addf %134, %135 : vector<8x128xf32>
    %137 = arith.negf %136 : vector<8x128xf32>
    %138 = math.exp %137 : vector<8x128xf32>
    %cst_40 = arith.constant 1.000000e+00 : f32
    %139 = vector.broadcast %cst_40 : f32 to vector<8x128xf32>
    %140 = arith.addf %139, %138 : vector<8x128xf32>
    %141 = arith.divf %139, %140 : vector<8x128xf32>
    %142 = math.tanh %136 : vector<8x128xf32>
    %143 = vector.extract_strided_slice %141 {offsets = [0, 0], sizes = [8, 32], strides = [1, 1]} : vector<8x128xf32> to vector<8x32xf32>
    %144 = vector.extract_strided_slice %141 {offsets = [0, 32], sizes = [8, 32], strides = [1, 1]} : vector<8x128xf32> to vector<8x32xf32>
    %145 = vector.extract_strided_slice %142 {offsets = [0, 64], sizes = [8, 32], strides = [1, 1]} : vector<8x128xf32> to vector<8x32xf32>
    %146 = vector.extract_strided_slice %141 {offsets = [0, 96], sizes = [8, 32], strides = [1, 1]} : vector<8x128xf32> to vector<8x32xf32>
    %147 = arith.mulf %144, %129 : vector<8x32xf32>
    %148 = arith.mulf %143, %145 : vector<8x32xf32>
    %149 = arith.addf %147, %148 : vector<8x32xf32>
    %150 = math.tanh %149 : vector<8x32xf32>
    %151 = arith.mulf %146, %150 : vector<8x32xf32>
    %c7_i32 = arith.constant 7 : i32
    %152 = arith.index_cast %c7_i32 : i32 to index
    %c0_41 = arith.constant 0 : index
    %c0_42 = arith.constant 0 : index
    %153 = vector.load %arg7[%152, %c0_41, %c0_42] : memref<8x8x128xf32, #tpu.memory_space<vmem>>, vector<1x8x128xf32>
    %154 = vector.shape_cast %153 : vector<1x8x128xf32> to vector<8x128xf32>
    %cst_43 = arith.constant dense<0.000000e+00> : vector<8x128xf32>
    %155 = tpu.matmul %151, %9, %cst_43 {dimension_numbers = #tpu.dot_dimension_numbers<[1], [0], [0], [1], [0, 0, 1, 1], [], []>} : vector<8x32xf32>, vector<32x128xf32>, vector<8x128xf32> -> vector<8x128xf32>
    %156 = arith.addf %154, %155 : vector<8x128xf32>
    %157 = arith.negf %156 : vector<8x128xf32>
    %158 = math.exp %157 : vector<8x128xf32>
    %cst_44 = arith.constant 1.000000e+00 : f32
    %159 = vector.broadcast %cst_44 : f32 to vector<8x128xf32>
    %160 = arith.addf %159, %158 : vector<8x128xf32>
    %161 = arith.divf %159, %160 : vector<8x128xf32>
    %162 = math.tanh %156 : vector<8x128xf32>
    %163 = vector.extract_strided_slice %161 {offsets = [0, 0], sizes = [8, 32], strides = [1, 1]} : vector<8x128xf32> to vector<8x32xf32>
    %164 = vector.extract_strided_slice %161 {offsets = [0, 32], sizes = [8, 32], strides = [1, 1]} : vector<8x128xf32> to vector<8x32xf32>
    %165 = vector.extract_strided_slice %162 {offsets = [0, 64], sizes = [8, 32], strides = [1, 1]} : vector<8x128xf32> to vector<8x32xf32>
    %166 = vector.extract_strided_slice %161 {offsets = [0, 96], sizes = [8, 32], strides = [1, 1]} : vector<8x128xf32> to vector<8x32xf32>
    %167 = arith.mulf %164, %149 : vector<8x32xf32>
    %168 = arith.mulf %163, %165 : vector<8x32xf32>
    %169 = arith.addf %167, %168 : vector<8x32xf32>
    %170 = math.tanh %169 : vector<8x32xf32>
    %171 = arith.mulf %166, %170 : vector<8x32xf32>
    %c8_i32 = arith.constant 8 : i32
    %c0_45 = arith.constant 0 : index
    %c0_46 = arith.constant 0 : index
    %172 = vector.load %arg4[%c0_45, %c0_46] : memref<32x128xf32, #tpu.memory_space<vmem>>, vector<32x128xf32>
    %cst_47 = arith.constant dense<0.000000e+00> : vector<8x128xf32>
    %173 = tpu.matmul %171, %172, %cst_47 {dimension_numbers = #tpu.dot_dimension_numbers<[1], [0], [0], [1], [0, 0, 1, 1], [], []>} : vector<8x32xf32>, vector<32x128xf32>, vector<8x128xf32> -> vector<8x128xf32>
    %c0_48 = arith.constant 0 : index
    %c0_49 = arith.constant 0 : index
    %174 = vector.load %arg5[%c0_48, %c0_49] : memref<1x128xf32, #tpu.memory_space<vmem>>, vector<1x128xf32>
    %175 = vector.broadcast %174 : vector<1x128xf32> to vector<8x128xf32>
    %176 = arith.addf %173, %175 : vector<8x128xf32>
    %c0_50 = arith.constant 0 : index
    %c0_51 = arith.constant 0 : index
    %177 = vector.load %arg6[%c0_50, %c0_51] : memref<8x128xf32, #tpu.memory_space<vmem>>, vector<8x128xf32>
    tpu.vector_store %arg6[%c0_50, %c0_51], %176 {strides = array<i32>} : memref<8x128xf32, #tpu.memory_space<vmem>>, vector<8x128xf32>,
    return
  }
}

</mosaic_0001>

<llo_original>
// kernel: rnn_model_forward.1
$region0: #{rnn_model_forward.1}
  #allocation0 [shape = 'u32[]', space=smem, size = 0x4, offset = 0x4, fixed_abs, tag = 'smem constant byte address 0x4 - core index']
  #allocation1 [shape = 'u32[144,128]{1,0:T(1,128)}', space=vmem, size = 0x12000, scoped, tag = 'internal scratch']
  #allocation2 [shape = 'f32[8,8,128]{2,1,0:T(8,128)}', space=vmem, size = 0x8000, scoped, tag = 'scratch operand']
  %s0 = inlined_call_operand.vmem [shape: f32[8,8,8], index: 0, kind: input, shape index: {}]
  %s1 = inlined_call_operand.vmem [shape: f32[8,128], index: 1, kind: input, shape index: {}]
  %s2 = inlined_call_operand.vmem [shape: f32[32,128], index: 2, kind: input, shape index: {}]
  %s3 = inlined_call_operand.vmem [shape: f32[1,128], index: 3, kind: input, shape index: {}]
  %s4 = inlined_call_operand.vmem [shape: f32[32,128], index: 4, kind: input, shape index: {}]
  %s5 = inlined_call_operand.vmem [shape: f32[1,128], index: 5, kind: input, shape index: {}]
  %s6 = inlined_call_operand.vmem [shape: f32[8,128], index: 6, kind: output, shape index: {}]
  %s7 = sld [smem:[#allocation0]]
  $region34: #{rnn_model_forward.1} parent=0
    _
  %s9 = ssub.s32 1, %s7
  %s10 = scalar_select 0, %s9, %s7
  // Predicated region
  $region2: #{rnn_model_forward.1} parent=0 // pred_check
    _
  $region3: #{rnn_model_forward.1} parent=0 // pred_check_branch
    %12 = sbr.rel (0) target = $region5
  $region4: #{rnn_model_forward.1} parent=0 // pred_region
    _
  $region5: #{rnn_model_forward.1} parent=0 // pred_fallthru
    _
  // Predicated region
  $region6: #{rnn_model_forward.1} parent=0 // pred_check
    _
  $region7: #{rnn_model_forward.1} parent=0 // pred_check_branch
    %14 = sbr.rel (0) target = $region9
  $region8: #{rnn_model_forward.1} parent=0 // pred_region
    _
  $region9: #{rnn_model_forward.1} parent=0 // pred_fallthru
    _
  // Predicated region
  $region10: #{rnn_model_forward.1} parent=0 // pred_check
    _
  $region11: #{rnn_model_forward.1} parent=0 // pred_check_branch
    %16 = sbr.rel (0) target = $region13
  $region12: #{rnn_model_forward.1} parent=0 // pred_region
    _
  $region13: #{rnn_model_forward.1} parent=0 // pred_fallthru
    _
  // Predicated region
  $region14: #{rnn_model_forward.1} parent=0 // pred_check
    _
  $region15: #{rnn_model_forward.1} parent=0 // pred_check_branch
    %18 = sbr.rel (0) target = $region17
  $region16: #{rnn_model_forward.1} parent=0 // pred_region
    _
  $region17: #{rnn_model_forward.1} parent=0 // pred_fallthru
    _
  // Predicated region
  $region18: #{rnn_model_forward.1} parent=0 // pred_check
    _
  $region19: #{rnn_model_forward.1} parent=0 // pred_check_branch
    %20 = sbr.rel (0) target = $region21
  $region20: #{rnn_model_forward.1} parent=0 // pred_region
    _
  $region21: #{rnn_model_forward.1} parent=0 // pred_fallthru
    _
  // Predicated region
  $region22: #{rnn_model_forward.1} parent=0 // pred_check
    _
  $region23: #{rnn_model_forward.1} parent=0 // pred_check_branch
    %22 = sbr.rel (0) target = $region25
  $region24: #{rnn_model_forward.1} parent=0 // pred_region
    _
  $region25: #{rnn_model_forward.1} parent=0 // pred_fallthru
    _
  %v23 = vld [vmem:[%s0] sm:$0xff]
  %v24 = vld [vmem:[%s0 + $0x8] sm:$0xff]
  %v25 = vld [vmem:[%s0 + $0x10] sm:$0xff]
  %v26 = vld [vmem:[%s0 + $0x18] sm:$0xff]
  %v27 = vld [vmem:[%s0 + $0x20] sm:$0xff]
  %v28 = vld [vmem:[%s0 + $0x28] sm:$0xff]
  %v29 = vld [vmem:[%s0 + $0x30] sm:$0xff]
  %v30 = vld [vmem:[%s0 + $0x38] sm:$0xff]
  %v31 = vld [vmem:[%s1] sm:$0xff]
  %v32 = vld [vmem:[%s3] sm:$0x1]
  %v34 = vlaneseq
  %v35 = vshrl.u32 %v34, 7
  %v36 = vsub.s32 0, %v35
  %v37 = vrot.slane %v32, %v36
  %vm39 = vcmask 64512
  %v41 = vsel %vm39, %v23, 0
  %v44 = vsel %vm39, %v24, 0
  %v47 = vsel %vm39, %v25, 0
  %v50 = vsel %vm39, %v26, 0
  %v53 = vsel %vm39, %v27, 0
  %v56 = vsel %vm39, %v28, 0
  %v59 = vsel %vm39, %v29, 0
  %v62 = vsel %vm39, %v30, 0
  %64 = vmatprep.subr.mxu0 0.0
  %65 = vmatpush1.msra.mxu0 0.0
  %66 = vmatprep.subr.mxu0 0.0
  %67 = vmatpush1.msra.mxu0 0.0
  %68 = vmatprep.subr.mxu0 0.0
  %69 = vmatpush1.msra.mxu0 0.0
  %70 = vmatprep.subr.mxu0 0.0
  %71 = vmatpush1.msra.mxu0 0.0
  %72 = vmatprep.subr.mxu0 0.0
  %73 = vmatpush1.msra.mxu0 0.0
  %74 = vmatprep.subr.mxu0 0.0
  %75 = vmatpush1.msra.mxu0 0.0
  %76 = vmatprep.subr.mxu0 0.0
  %77 = vmatpush1.msra.mxu0 0.0
  %78 = vmatprep.subr.mxu0 0.0
  %79 = vmatpush1.msra.mxu0 0.0
  %80 = vmatprep.subr.mxu0 0.0
  %81 = vmatpush1.msra.mxu0 0.0
  %82 = vmatprep.subr.mxu0 0.0
  %83 = vmatpush1.msra.mxu0 0.0
  %84 = vmatprep.subr.mxu0 0.0
  %85 = vmatpush1.msra.mxu0 0.0
  %86 = vmatprep.subr.mxu0 0.0
  %87 = vmatpush1.msra.mxu0 0.0
  %88 = vmatprep.subr.mxu0 0.0
  %89 = vmatpush1.msra.mxu0 0.0
  %90 = vmatprep.subr.mxu0 0.0
  %91 = vmatpush1.msra.mxu0 0.0
  %92 = vmatprep.subr.mxu0 0.0
  %93 = vmatpush1.msra.mxu0 0.0
  %94 = vmatprep.subr.mxu0 0.0
  %95 = vmatpush1.msra.mxu0 %v31
  %96 = vmatprep.subr.mxu0 0.0
  %97 = vmatpush2.msra.mxu0 0.0
  %98 = vmatprep.subr.mxu0 0.0
  %99 = vmatpush2.msra.mxu0 0.0
  %100 = vmatprep.subr.mxu0 0.0
  %101 = vmatpush2.msra.mxu0 0.0
  %102 = vmatprep.subr.mxu0 0.0
  %103 = vmatpush2.msra.mxu0 0.0
  %104 = vmatprep.subr.mxu0 0.0
  %105 = vmatpush2.msra.mxu0 0.0
  %106 = vmatprep.subr.mxu0 0.0
  %107 = vmatpush2.msra.mxu0 0.0
  %108 = vmatprep.subr.mxu0 0.0
  %109 = vmatpush2.msra.mxu0 0.0
  %110 = vmatprep.subr.mxu0 0.0
  %111 = vmatpush2.msra.mxu0 0.0
  %112 = vmatprep.subr.mxu0 0.0
  %113 = vmatpush2.msra.mxu0 0.0
  %114 = vmatprep.subr.mxu0 0.0
  %115 = vmatpush2.msra.mxu0 0.0
  %116 = vmatprep.subr.mxu0 0.0
  %117 = vmatpush2.msra.mxu0 0.0
  %118 = vmatprep.subr.mxu0 0.0
  %119 = vmatpush2.msra.mxu0 0.0
  %120 = vmatprep.subr.mxu0 0.0
  %121 = vmatpush2.msra.mxu0 0.0
  %122 = vmatprep.subr.mxu0 0.0
  %123 = vmatpush2.msra.mxu0 0.0
  %124 = vmatprep.subr.mxu0 0.0
  %125 = vmatpush2.msra.mxu0 0.0
  %126 = vmatprep.subr.mxu0 0.0
  %127 = vmatpush2.msra.mxu0 0.0
  %128 = vmatprep.mubr.f32.mxu0 0.0
  %129 = vmatmul.mubr.f32.gmra.mxu0 %v41
  %v130 = vpop.f32.mrf.mxu0
  %v131 = vadd.f32 %v37, %v130
  %v132 = vpop.f32.mrf.mxu0
  %133 = vmatprep.mubr.f32.mxu0 0.0
  %134 = vmatmul.mubr.f32.gmra.mxu0 %v44
  %v135 = vpop.f32.mrf.mxu0
  %v136 = vadd.f32 %v37, %v135
  %v137 = vpop.f32.mrf.mxu0
  %138 = vmatprep.mubr.f32.mxu0 0.0
  %139 = vmatmul.mubr.f32.gmra.mxu0 %v47
  %v140 = vpop.f32.mrf.mxu0
  %v141 = vadd.f32 %v37, %v140
  %v142 = vpop.f32.mrf.mxu0
  %143 = vmatprep.mubr.f32.mxu0 0.0
  %144 = vmatmul.mubr.f32.gmra.mxu0 %v50
  %v145 = vpop.f32.mrf.mxu0
  %v146 = vadd.f32 %v37, %v145
  %v147 = vpop.f32.mrf.mxu0
  %148 = vmatprep.mubr.f32.mxu0 0.0
  %149 = vmatmul.mubr.f32.gmra.mxu0 %v53
  %v150 = vpop.f32.mrf.mxu0
  %v151 = vadd.f32 %v37, %v150
  %v152 = vpop.f32.mrf.mxu0
  %153 = vmatprep.mubr.f32.mxu0 0.0
  %154 = vmatmul.mubr.f32.gmra.mxu0 %v56
  %v155 = vpop.f32.mrf.mxu0
  %v156 = vadd.f32 %v37, %v155
  %v157 = vpop.f32.mrf.mxu0
  %158 = vmatprep.mubr.f32.mxu0 0.0
  %159 = vmatmul.mubr.f32.gmra.mxu0 %v59
  %v160 = vpop.f32.mrf.mxu0
  %v161 = vadd.f32 %v37, %v160
  %v162 = vpop.f32.mrf.mxu0
  %163 = vmatprep.mubr.f32.mxu0 0.0
  %164 = vmatmul.mubr.f32.gmra.mxu0 %v62
  %v165 = vpop.f32.mrf.mxu0
  %v166 = vadd.f32 %v37, %v165
  %v167 = vpop.f32.mrf.mxu0
  %168 = vdwg.mxu0
  %169 = vst [vmem:[#allocation2] sm:$0xff] %v131
  %170 = vst [vmem:[#allocation2 + $0x8] sm:$0xff] %v136
  %171 = vst [vmem:[#allocation2 + $0x10] sm:$0xff] %v141
  %172 = vst [vmem:[#allocation2 + $0x18] sm:$0xff] %v146
  %173 = vst [vmem:[#allocation2 + $0x20] sm:$0xff] %v151
  %174 = vst [vmem:[#allocation2 + $0x28] sm:$0xff] %v156
  %175 = vst [vmem:[#allocation2 + $0x30] sm:$0xff] %v161
  %176 = vst [vmem:[#allocation2 + $0x38] sm:$0xff] %v166
  %v177 = vld [vmem:[%s2] sm:$0xff]
  %v178 = vld [vmem:[%s2 + $0x8] sm:$0xff]
  %v179 = vld [vmem:[%s2 + $0x10] sm:$0xff]
  %v180 = vld [vmem:[%s2 + $0x18] sm:$0xff]
  %v181 = vld [vmem:[#allocation2] sm:$0xff]
  %vm182 = vcmask 261120
  %v184 = vsel %vm182, 0.0, 0
  %186 = vmatprep.subr.mxu0 0.0
  %187 = vmatpush1.msra.mxu0 0.0
  %188 = vmatprep.subr.mxu0 0.0
  %189 = vmatpush1.msra.mxu0 0.0
  %190 = vmatprep.subr.mxu0 0.0
  %191 = vmatpush1.msra.mxu0 0.0
  %192 = vmatprep.subr.mxu0 0.0
  %193 = vmatpush1.msra.mxu0 0.0
  %194 = vmatprep.subr.mxu0 0.0
  %195 = vmatpush1.msra.mxu0 0.0
  %196 = vmatprep.subr.mxu0 0.0
  %197 = vmatpush1.msra.mxu0 0.0
  %198 = vmatprep.subr.mxu0 0.0
  %199 = vmatpush1.msra.mxu0 0.0
  %200 = vmatprep.subr.mxu0 0.0
  %201 = vmatpush1.msra.mxu0 0.0
  %202 = vmatprep.subr.mxu0 0.0
  %203 = vmatpush1.msra.mxu0 0.0
  %204 = vmatprep.subr.mxu0 0.0
  %205 = vmatpush1.msra.mxu0 0.0
  %206 = vmatprep.subr.mxu0 0.0
  %207 = vmatpush1.msra.mxu0 0.0
  %208 = vmatprep.subr.mxu0 0.0
  %209 = vmatpush1.msra.mxu0 0.0
  %210 = vmatprep.subr.mxu0 0.0
  %211 = vmatpush1.msra.mxu0 %v180
  %212 = vmatprep.subr.mxu0 0.0
  %213 = vmatpush1.msra.mxu0 %v179
  %214 = vmatprep.subr.mxu0 0.0
  %215 = vmatpush1.msra.mxu0 %v178
  %216 = vmatprep.subr.mxu0 0.0
  %217 = vmatpush1.msra.mxu0 %v177
  %218 = vmatprep.subr.mxu0 0.0
  %219 = vmatpush2.msra.mxu0 0.0
  %220 = vmatprep.subr.mxu0 0.0
  %221 = vmatpush2.msra.mxu0 0.0
  %222 = vmatprep.subr.mxu0 0.0
  %223 = vmatpush2.msra.mxu0 0.0
  %224 = vmatprep.subr.mxu0 0.0
  %225 = vmatpush2.msra.mxu0 0.0
  %226 = vmatprep.subr.mxu0 0.0
  %227 = vmatpush2.msra.mxu0 0.0
  %228 = vmatprep.subr.mxu0 0.0
  %229 = vmatpush2.msra.mxu0 0.0
  %230 = vmatprep.subr.mxu0 0.0
  %231 = vmatpush2.msra.mxu0 0.0
  %232 = vmatprep.subr.mxu0 0.0
  %233 = vmatpush2.msra.mxu0 0.0
  %234 = vmatprep.subr.mxu0 0.0
  %235 = vmatpush2.msra.mxu0 0.0
  %236 = vmatprep.subr.mxu0 0.0
  %237 = vmatpush2.msra.mxu0 0.0
  %238 = vmatprep.subr.mxu0 0.0
  %239 = vmatpush2.msra.mxu0 0.0
  %240 = vmatprep.subr.mxu0 0.0
  %241 = vmatpush2.msra.mxu0 0.0
  %242 = vmatprep.subr.mxu0 0.0
  %243 = vmatpush2.msra.mxu0 0.0
  %244 = vmatprep.subr.mxu0 0.0
  %245 = vmatpush2.msra.mxu0 0.0
  %246 = vmatprep.subr.mxu0 0.0
  %247 = vmatpush2.msra.mxu0 0.0
  %248 = vmatprep.subr.mxu0 0.0
  %249 = vmatpush2.msra.mxu0 0.0
  %250 = vmatprep.mubr.f32.mxu0 0.0
  %251 = vmatmul.mubr.f32.gmra.mxu0 %v184
  %v252 = vpop.f32.mrf.mxu0
  %v253 = vadd.f32 0.0, %v252
  %v254 = vpop.f32.mrf.mxu0
  %255 = vdwg.mxu0
  %v256 = vadd.f32 %v181, %v253
  %v257 = vxor.u32 %v256, 2147483648
  %v258 = vmul.f32 %v257, 1.442695
  %v259 = vpow.pop %v258
  %v260 = vadd.f32 %v259, 1.0
  %v261 = vrcp.pop %v260
  %v262 = vmul.f32 1.0, %v261
  %v263 = vtanh.pop %v256
  %v264 = vmul.f32 %v262, 0.0
  %266 = vrot.lane.b32.xlu0 %v263, 64
  %v267 = vpop.permute.xlu0 %266
  %v269 = vmul.f32 %v262, %v267
  %271 = vrot.lane.b32.xlu0 %v269, 32
  %v272 = vpop.permute.xlu0 %271
  %v274 = vadd.f32 %v264, %v272
  %v275 = vtanh.pop %v274
  %277 = vrot.lane.b32.xlu0 %v275, 64
  %v278 = vpop.permute.xlu0 %277
  %v280 = vmul.f32 %v262, %v278
  %s281 = scalar_lea.vmem [#allocation2], 8
  %v282 = vld [vmem:[%s281] sm:$0xff]
  %284 = vrot.lane.b32.xlu0 %v280, 32
  %v285 = vpop.permute.xlu0 %284
  %v286 = vsel %vm182, %v285, 0
  %288 = vmatprep.subr.mxu0 0.0
  %289 = vmatpush1.msra.mxu0 0.0
  %290 = vmatprep.subr.mxu0 0.0
  %291 = vmatpush1.msra.mxu0 0.0
  %292 = vmatprep.subr.mxu0 0.0
  %293 = vmatpush1.msra.mxu0 0.0
  %294 = vmatprep.subr.mxu0 0.0
  %295 = vmatpush1.msra.mxu0 0.0
  %296 = vmatprep.subr.mxu0 0.0
  %297 = vmatpush1.msra.mxu0 0.0
  %298 = vmatprep.subr.mxu0 0.0
  %299 = vmatpush1.msra.mxu0 0.0
  %300 = vmatprep.subr.mxu0 0.0
  %301 = vmatpush1.msra.mxu0 0.0
  %302 = vmatprep.subr.mxu0 0.0
  %303 = vmatpush1.msra.mxu0 0.0
  %304 = vmatprep.subr.mxu0 0.0
  %305 = vmatpush1.msra.mxu0 0.0
  %306 = vmatprep.subr.mxu0 0.0
  %307 = vmatpush1.msra.mxu0 0.0
  %308 = vmatprep.subr.mxu0 0.0
  %309 = vmatpush1.msra.mxu0 0.0
  %310 = vmatprep.subr.mxu0 0.0
  %311 = vmatpush1.msra.mxu0 0.0
  %312 = vmatprep.subr.mxu0 0.0
  %313 = vmatpush1.msra.mxu0 %v180
  %314 = vmatprep.subr.mxu0 0.0
  %315 = vmatpush1.msra.mxu0 %v179
  %316 = vmatprep.subr.mxu0 0.0
  %317 = vmatpush1.msra.mxu0 %v178
  %318 = vmatprep.subr.mxu0 0.0
  %319 = vmatpush1.msra.mxu0 %v177
  %320 = vmatprep.subr.mxu0 0.0
  %321 = vmatpush2.msra.mxu0 0.0
  %322 = vmatprep.subr.mxu0 0.0
  %323 = vmatpush2.msra.mxu0 0.0
  %324 = vmatprep.subr.mxu0 0.0
  %325 = vmatpush2.msra.mxu0 0.0
  %326 = vmatprep.subr.mxu0 0.0
  %327 = vmatpush2.msra.mxu0 0.0
  %328 = vmatprep.subr.mxu0 0.0
  %329 = vmatpush2.msra.mxu0 0.0
  %330 = vmatprep.subr.mxu0 0.0
  %331 = vmatpush2.msra.mxu0 0.0
  %332 = vmatprep.subr.mxu0 0.0
  %333 = vmatpush2.msra.mxu0 0.0
  %334 = vmatprep.subr.mxu0 0.0
  %335 = vmatpush2.msra.mxu0 0.0
  %336 = vmatprep.subr.mxu0 0.0
  %337 = vmatpush2.msra.mxu0 0.0
  %338 = vmatprep.subr.mxu0 0.0
  %339 = vmatpush2.msra.mxu0 0.0
  %340 = vmatprep.subr.mxu0 0.0
  %341 = vmatpush2.msra.mxu0 0.0
  %342 = vmatprep.subr.mxu0 0.0
  %343 = vmatpush2.msra.mxu0 0.0
  %344 = vmatprep.subr.mxu0 0.0
  %345 = vmatpush2.msra.mxu0 0.0
  %346 = vmatprep.subr.mxu0 0.0
  %347 = vmatpush2.msra.mxu0 0.0
  %348 = vmatprep.subr.mxu0 0.0
  %349 = vmatpush2.msra.mxu0 0.0
  %350 = vmatprep.subr.mxu0 0.0
  %351 = vmatpush2.msra.mxu0 0.0
  %352 = vmatprep.mubr.f32.mxu0 0.0
  %353 = vmatmul.mubr.f32.gmra.mxu0 %v286
  %v354 = vpop.f32.mrf.mxu0
  %v355 = vadd.f32 0.0, %v354
  %v356 = vpop.f32.mrf.mxu0
  %357 = vdwg.mxu0
  %v358 = vadd.f32 %v282, %v355
  %v359 = vxor.u32 %v358, 2147483648
  %v360 = vmul.f32 %v359, 1.442695
  %v361 = vpow.pop %v360
  %v362 = vadd.f32 %v361, 1.0
  %v363 = vrcp.pop %v362
  %v364 = vmul.f32 1.0, %v363
  %v365 = vtanh.pop %v358
  %v366 = vmul.f32 %v364, %v274
  %368 = vrot.lane.b32.xlu0 %v365, 64
  %v369 = vpop.permute.xlu0 %368
  %v371 = vmul.f32 %v364, %v369
  %373 = vrot.lane.b32.xlu0 %v371, 32
  %v374 = vpop.permute.xlu0 %373
  %v376 = vadd.f32 %v366, %v374
  %v377 = vtanh.pop %v376
  %379 = vrot.lane.b32.xlu0 %v377, 64
  %v380 = vpop.permute.xlu0 %379
  %v382 = vmul.f32 %v364, %v380
  %s383 = scalar_lea.vmem [#allocation2], 16
  %v384 = vld [vmem:[%s383] sm:$0xff]
  %386 = vrot.lane.b32.xlu0 %v382, 32
  %v387 = vpop.permute.xlu0 %386
  %v388 = vsel %vm182, %v387, 0
  %390 = vmatprep.subr.mxu0 0.0
  %391 = vmatpush1.msra.mxu0 0.0
  %392 = vmatprep.subr.mxu0 0.0
  %393 = vmatpush1.msra.mxu0 0.0
  %394 = vmatprep.subr.mxu0 0.0
  %395 = vmatpush1.msra.mxu0 0.0
  %396 = vmatprep.subr.mxu0 0.0
  %397 = vmatpush1.msra.mxu0 0.0
  %398 = vmatprep.subr.mxu0 0.0
  %399 = vmatpush1.msra.mxu0 0.0
  %400 = vmatprep.subr.mxu0 0.0
  %401 = vmatpush1.msra.mxu0 0.0
  %402 = vmatprep.subr.mxu0 0.0
  %403 = vmatpush1.msra.mxu0 0.0
  %404 = vmatprep.subr.mxu0 0.0
  %405 = vmatpush1.msra.mxu0 0.0
  %406 = vmatprep.subr.mxu0 0.0
  %407 = vmatpush1.msra.mxu0 0.0
  %408 = vmatprep.subr.mxu0 0.0
  %409 = vmatpush1.msra.mxu0 0.0
  %410 = vmatprep.subr.mxu0 0.0
  %411 = vmatpush1.msra.mxu0 0.0
  %412 = vmatprep.subr.mxu0 0.0
  %413 = vmatpush1.msra.mxu0 0.0
  %414 = vmatprep.subr.mxu0 0.0
  %415 = vmatpush1.msra.mxu0 %v180
  %416 = vmatprep.subr.mxu0 0.0
  %417 = vmatpush1.msra.mxu0 %v179
  %418 = vmatprep.subr.mxu0 0.0
  %419 = vmatpush1.msra.mxu0 %v178
  %420 = vmatprep.subr.mxu0 0.0
  %421 = vmatpush1.msra.mxu0 %v177
  %422 = vmatprep.subr.mxu0 0.0
  %423 = vmatpush2.msra.mxu0 0.0
  %424 = vmatprep.subr.mxu0 0.0
  %425 = vmatpush2.msra.mxu0 0.0
  %426 = vmatprep.subr.mxu0 0.0
  %427 = vmatpush2.msra.mxu0 0.0
  %428 = vmatprep.subr.mxu0 0.0
  %429 = vmatpush2.msra.mxu0 0.0
  %430 = vmatprep.subr.mxu0 0.0
  %431 = vmatpush2.msra.mxu0 0.0
  %432 = vmatprep.subr.mxu0 0.0
  %433 = vmatpush2.msra.mxu0 0.0
  %434 = vmatprep.subr.mxu0 0.0
  %435 = vmatpush2.msra.mxu0 0.0
  %436 = vmatprep.subr.mxu0 0.0
  %437 = vmatpush2.msra.mxu0 0.0
  %438 = vmatprep.subr.mxu0 0.0
  %439 = vmatpush2.msra.mxu0 0.0
  %440 = vmatprep.subr.mxu0 0.0
  %441 = vmatpush2.msra.mxu0 0.0
  %442 = vmatprep.subr.mxu0 0.0
  %443 = vmatpush2.msra.mxu0 0.0
  %444 = vmatprep.subr.mxu0 0.0
  %445 = vmatpush2.msra.mxu0 0.0
  %446 = vmatprep.subr.mxu0 0.0
  %447 = vmatpush2.msra.mxu0 0.0
  %448 = vmatprep.subr.mxu0 0.0
  %449 = vmatpush2.msra.mxu0 0.0
  %450 = vmatprep.subr.mxu0 0.0
  %451 = vmatpush2.msra.mxu0 0.0
  %452 = vmatprep.subr.mxu0 0.0
  %453 = vmatpush2.msra.mxu0 0.0
  %454 = vmatprep.mubr.f32.mxu0 0.0
  %455 = vmatmul.mubr.f32.gmra.mxu0 %v388
  %v456 = vpop.f32.mrf.mxu0
  %v457 = vadd.f32 0.0, %v456
  %v458 = vpop.f32.mrf.mxu0
  %459 = vdwg.mxu0
  %v460 = vadd.f32 %v384, %v457
  %v461 = vxor.u32 %v460, 2147483648
  %v462 = vmul.f32 %v461, 1.442695
  %v463 = vpow.pop %v462
  %v464 = vadd.f32 %v463, 1.0
  %v465 = vrcp.pop %v464
  %v466 = vmul.f32 1.0, %v465
  %v467 = vtanh.pop %v460
  %v468 = vmul.f32 %v466, %v376
  %470 = vrot.lane.b32.xlu0 %v467, 64
  %v471 = vpop.permute.xlu0 %470
  %v473 = vmul.f32 %v466, %v471
  %475 = vrot.lane.b32.xlu0 %v473, 32
  %v476 = vpop.permute.xlu0 %475
  %v478 = vadd.f32 %v468, %v476
  %v479 = vtanh.pop %v478
  %481 = vrot.lane.b32.xlu0 %v479, 64
  %v482 = vpop.permute.xlu0 %481
  %v484 = vmul.f32 %v466, %v482
  %s485 = scalar_lea.vmem [#allocation2], 24
  %v486 = vld [vmem:[%s485] sm:$0xff]
  %488 = vrot.lane.b32.xlu0 %v484, 32
  %v489 = vpop.permute.xlu0 %488
  %v490 = vsel %vm182, %v489, 0
  %492 = vmatprep.subr.mxu0 0.0
  %493 = vmatpush1.msra.mxu0 0.0
  %494 = vmatprep.subr.mxu0 0.0
  %495 = vmatpush1.msra.mxu0 0.0
  %496 = vmatprep.subr.mxu0 0.0
  %497 = vmatpush1.msra.mxu0 0.0
  %498 = vmatprep.subr.mxu0 0.0
  %499 = vmatpush1.msra.mxu0 0.0
  %500 = vmatprep.subr.mxu0 0.0
  %501 = vmatpush1.msra.mxu0 0.0
  %502 = vmatprep.subr.mxu0 0.0
  %503 = vmatpush1.msra.mxu0 0.0
  %504 = vmatprep.subr.mxu0 0.0
  %505 = vmatpush1.msra.mxu0 0.0
  %506 = vmatprep.subr.mxu0 0.0
  %507 = vmatpush1.msra.mxu0 0.0
  %508 = vmatprep.subr.mxu0 0.0
  %509 = vmatpush1.msra.mxu0 0.0
  %510 = vmatprep.subr.mxu0 0.0
  %511 = vmatpush1.msra.mxu0 0.0
  %512 = vmatprep.subr.mxu0 0.0
  %513 = vmatpush1.msra.mxu0 0.0
  %514 = vmatprep.subr.mxu0 0.0
  %515 = vmatpush1.msra.mxu0 0.0
  %516 = vmatprep.subr.mxu0 0.0
  %517 = vmatpush1.msra.mxu0 %v180
  %518 = vmatprep.subr.mxu0 0.0
  %519 = vmatpush1.msra.mxu0 %v179
  %520 = vmatprep.subr.mxu0 0.0
  %521 = vmatpush1.msra.mxu0 %v178
  %522 = vmatprep.subr.mxu0 0.0
  %523 = vmatpush1.msra.mxu0 %v177
  %524 = vmatprep.subr.mxu0 0.0
  %525 = vmatpush2.msra.mxu0 0.0
  %526 = vmatprep.subr.mxu0 0.0
  %527 = vmatpush2.msra.mxu0 0.0
  %528 = vmatprep.subr.mxu0 0.0
  %529 = vmatpush2.msra.mxu0 0.0
  %530 = vmatprep.subr.mxu0 0.0
  %531 = vmatpush2.msra.mxu0 0.0
  %532 = vmatprep.subr.mxu0 0.0
  %533 = vmatpush2.msra.mxu0 0.0
  %534 = vmatprep.subr.mxu0 0.0
  %535 = vmatpush2.msra.mxu0 0.0
  %536 = vmatprep.subr.mxu0 0.0
  %537 = vmatpush2.msra.mxu0 0.0
  %538 = vmatprep.subr.mxu0 0.0
  %539 = vmatpush2.msra.mxu0 0.0
  %540 = vmatprep.subr.mxu0 0.0
  %541 = vmatpush2.msra.mxu0 0.0
  %542 = vmatprep.subr.mxu0 0.0
  %543 = vmatpush2.msra.mxu0 0.0
  %544 = vmatprep.subr.mxu0 0.0
  %545 = vmatpush2.msra.mxu0 0.0
  %546 = vmatprep.subr.mxu0 0.0
  %547 = vmatpush2.msra.mxu0 0.0
  %548 = vmatprep.subr.mxu0 0.0
  %549 = vmatpush2.msra.mxu0 0.0
  %550 = vmatprep.subr.mxu0 0.0
  %551 = vmatpush2.msra.mxu0 0.0
  %552 = vmatprep.subr.mxu0 0.0
  %553 = vmatpush2.msra.mxu0 0.0
  %554 = vmatprep.subr.mxu0 0.0
  %555 = vmatpush2.msra.mxu0 0.0
  %556 = vmatprep.mubr.f32.mxu0 0.0
  %557 = vmatmul.mubr.f32.gmra.mxu0 %v490
  %v558 = vpop.f32.mrf.mxu0
  %v559 = vadd.f32 0.0, %v558
  %v560 = vpop.f32.mrf.mxu0
  %561 = vdwg.mxu0
  %v562 = vadd.f32 %v486, %v559
  %v563 = vxor.u32 %v562, 2147483648
  %v564 = vmul.f32 %v563, 1.442695
  %v565 = vpow.pop %v564
  %v566 = vadd.f32 %v565, 1.0
  %v567 = vrcp.pop %v566
  %v568 = vmul.f32 1.0, %v567
  %v569 = vtanh.pop %v562
  %v570 = vmul.f32 %v568, %v478
  %572 = vrot.lane.b32.xlu0 %v569, 64
  %v573 = vpop.permute.xlu0 %572
  %v575 = vmul.f32 %v568, %v573
  %577 = vrot.lane.b32.xlu0 %v575, 32
  %v578 = vpop.permute.xlu0 %577
  %v580 = vadd.f32 %v570, %v578
  %v581 = vtanh.pop %v580
  %583 = vrot.lane.b32.xlu0 %v581, 64
  %v584 = vpop.permute.xlu0 %583
  %v586 = vmul.f32 %v568, %v584
  %s587 = scalar_lea.vmem [#allocation2], 32
  %v588 = vld [vmem:[%s587] sm:$0xff]
  %590 = vrot.lane.b32.xlu0 %v586, 32
  %v591 = vpop.permute.xlu0 %590
  %v592 = vsel %vm182, %v591, 0
  %594 = vmatprep.subr.mxu0 0.0
  %595 = vmatpush1.msra.mxu0 0.0
  %596 = vmatprep.subr.mxu0 0.0
  %597 = vmatpush1.msra.mxu0 0.0
  %598 = vmatprep.subr.mxu0 0.0
  %599 = vmatpush1.msra.mxu0 0.0
  %600 = vmatprep.subr.mxu0 0.0
  %601 = vmatpush1.msra.mxu0 0.0
  %602 = vmatprep.subr.mxu0 0.0
  %603 = vmatpush1.msra.mxu0 0.0
  %604 = vmatprep.subr.mxu0 0.0
  %605 = vmatpush1.msra.mxu0 0.0
  %606 = vmatprep.subr.mxu0 0.0
  %607 = vmatpush1.msra.mxu0 0.0
  %608 = vmatprep.subr.mxu0 0.0
  %609 = vmatpush1.msra.mxu0 0.0
  %610 = vmatprep.subr.mxu0 0.0
  %611 = vmatpush1.msra.mxu0 0.0
  %612 = vmatprep.subr.mxu0 0.0
  %613 = vmatpush1.msra.mxu0 0.0
  %614 = vmatprep.subr.mxu0 0.0
  %615 = vmatpush1.msra.mxu0 0.0
  %616 = vmatprep.subr.mxu0 0.0
  %617 = vmatpush1.msra.mxu0 0.0
  %618 = vmatprep.subr.mxu0 0.0
  %619 = vmatpush1.msra.mxu0 %v180
  %620 = vmatprep.subr.mxu0 0.0
  %621 = vmatpush1.msra.mxu0 %v179
  %622 = vmatprep.subr.mxu0 0.0
  %623 = vmatpush1.msra.mxu0 %v178
  %624 = vmatprep.subr.mxu0 0.0
  %625 = vmatpush1.msra.mxu0 %v177
  %626 = vmatprep.subr.mxu0 0.0
  %627 = vmatpush2.msra.mxu0 0.0
  %628 = vmatprep.subr.mxu0 0.0
  %629 = vmatpush2.msra.mxu0 0.0
  %630 = vmatprep.subr.mxu0 0.0
  %631 = vmatpush2.msra.mxu0 0.0
  %632 = vmatprep.subr.mxu0 0.0
  %633 = vmatpush2.msra.mxu0 0.0
  %634 = vmatprep.subr.mxu0 0.0
  %635 = vmatpush2.msra.mxu0 0.0
  %636 = vmatprep.subr.mxu0 0.0
  %637 = vmatpush2.msra.mxu0 0.0
  %638 = vmatprep.subr.mxu0 0.0
  %639 = vmatpush2.msra.mxu0 0.0
  %640 = vmatprep.subr.mxu0 0.0
  %641 = vmatpush2.msra.mxu0 0.0
  %642 = vmatprep.subr.mxu0 0.0
  %643 = vmatpush2.msra.mxu0 0.0
  %644 = vmatprep.subr.mxu0 0.0
  %645 = vmatpush2.msra.mxu0 0.0
  %646 = vmatprep.subr.mxu0 0.0
  %647 = vmatpush2.msra.mxu0 0.0
  %648 = vmatprep.subr.mxu0 0.0
  %649 = vmatpush2.msra.mxu0 0.0
  %650 = vmatprep.subr.mxu0 0.0
  %651 = vmatpush2.msra.mxu0 0.0
  %652 = vmatprep.subr.mxu0 0.0
  %653 = vmatpush2.msra.mxu0 0.0
  %654 = vmatprep.subr.mxu0 0.0
  %655 = vmatpush2.msra.mxu0 0.0
  %656 = vmatprep.subr.mxu0 0.0
  %657 = vmatpush2.msra.mxu0 0.0
  %658 = vmatprep.mubr.f32.mxu0 0.0
  %659 = vmatmul.mubr.f32.gmra.mxu0 %v592
  %v660 = vpop.f32.mrf.mxu0
  %v661 = vadd.f32 0.0, %v660
  %v662 = vpop.f32.mrf.mxu0
  %663 = vdwg.mxu0
  %v664 = vadd.f32 %v588, %v661
  %v665 = vxor.u32 %v664, 2147483648
  %v666 = vmul.f32 %v665, 1.442695
  %v667 = vpow.pop %v666
  %v668 = vadd.f32 %v667, 1.0
  %v669 = vrcp.pop %v668
  %v670 = vmul.f32 1.0, %v669
  %v671 = vtanh.pop %v664
  %v672 = vmul.f32 %v670, %v580
  %674 = vrot.lane.b32.xlu0 %v671, 64
  %v675 = vpop.permute.xlu0 %674
  %v677 = vmul.f32 %v670, %v675
  %679 = vrot.lane.b32.xlu0 %v677, 32
  %v680 = vpop.permute.xlu0 %679
  %v682 = vadd.f32 %v672, %v680
  %v683 = vtanh.pop %v682
  %685 = vrot.lane.b32.xlu0 %v683, 64
  %v686 = vpop.permute.xlu0 %685
  %v688 = vmul.f32 %v670, %v686
  %s689 = scalar_lea.vmem [#allocation2], 40
  %v690 = vld [vmem:[%s689] sm:$0xff]
  %692 = vrot.lane.b32.xlu0 %v688, 32
  %v693 = vpop.permute.xlu0 %692
  %v694 = vsel %vm182, %v693, 0
  %696 = vmatprep.subr.mxu0 0.0
  %697 = vmatpush1.msra.mxu0 0.0
  %698 = vmatprep.subr.mxu0 0.0
  %699 = vmatpush1.msra.mxu0 0.0
  %700 = vmatprep.subr.mxu0 0.0
  %701 = vmatpush1.msra.mxu0 0.0
  %702 = vmatprep.subr.mxu0 0.0
  %703 = vmatpush1.msra.mxu0 0.0
  %704 = vmatprep.subr.mxu0 0.0
  %705 = vmatpush1.msra.mxu0 0.0
  %706 = vmatprep.subr.mxu0 0.0
  %707 = vmatpush1.msra.mxu0 0.0
  %708 = vmatprep.subr.mxu0 0.0
  %709 = vmatpush1.msra.mxu0 0.0
  %710 = vmatprep.subr.mxu0 0.0
  %711 = vmatpush1.msra.mxu0 0.0
  %712 = vmatprep.subr.mxu0 0.0
  %713 = vmatpush1.msra.mxu0 0.0
  %714 = vmatprep.subr.mxu0 0.0
  %715 = vmatpush1.msra.mxu0 0.0
  %716 = vmatprep.subr.mxu0 0.0
  %717 = vmatpush1.msra.mxu0 0.0
  %718 = vmatprep.subr.mxu0 0.0
  %719 = vmatpush1.msra.mxu0 0.0
  %720 = vmatprep.subr.mxu0 0.0
  %721 = vmatpush1.msra.mxu0 %v180
  %722 = vmatprep.subr.mxu0 0.0
  %723 = vmatpush1.msra.mxu0 %v179
  %724 = vmatprep.subr.mxu0 0.0
  %725 = vmatpush1.msra.mxu0 %v178
  %726 = vmatprep.subr.mxu0 0.0
  %727 = vmatpush1.msra.mxu0 %v177
  %728 = vmatprep.subr.mxu0 0.0
  %729 = vmatpush2.msra.mxu0 0.0
  %730 = vmatprep.subr.mxu0 0.0
  %731 = vmatpush2.msra.mxu0 0.0
  %732 = vmatprep.subr.mxu0 0.0
  %733 = vmatpush2.msra.mxu0 0.0
  %734 = vmatprep.subr.mxu0 0.0
  %735 = vmatpush2.msra.mxu0 0.0
  %736 = vmatprep.subr.mxu0 0.0
  %737 = vmatpush2.msra.mxu0 0.0
  %738 = vmatprep.subr.mxu0 0.0
  %739 = vmatpush2.msra.mxu0 0.0
  %740 = vmatprep.subr.mxu0 0.0
  %741 = vmatpush2.msra.mxu0 0.0
  %742 = vmatprep.subr.mxu0 0.0
  %743 = vmatpush2.msra.mxu0 0.0
  %744 = vmatprep.subr.mxu0 0.0
  %745 = vmatpush2.msra.mxu0 0.0
  %746 = vmatprep.subr.mxu0 0.0
  %747 = vmatpush2.msra.mxu0 0.0
  %748 = vmatprep.subr.mxu0 0.0
  %749 = vmatpush2.msra.mxu0 0.0
  %750 = vmatprep.subr.mxu0 0.0
  %751 = vmatpush2.msra.mxu0 0.0
  %752 = vmatprep.subr.mxu0 0.0
  %753 = vmatpush2.msra.mxu0 0.0
  %754 = vmatprep.subr.mxu0 0.0
  %755 = vmatpush2.msra.mxu0 0.0
  %756 = vmatprep.subr.mxu0 0.0
  %757 = vmatpush2.msra.mxu0 0.0
  %758 = vmatprep.subr.mxu0 0.0
  %759 = vmatpush2.msra.mxu0 0.0
  %760 = vmatprep.mubr.f32.mxu0 0.0
  %761 = vmatmul.mubr.f32.gmra.mxu0 %v694
  %v762 = vpop.f32.mrf.mxu0
  %v763 = vadd.f32 0.0, %v762
  %v764 = vpop.f32.mrf.mxu0
  %765 = vdwg.mxu0
  %v766 = vadd.f32 %v690, %v763
  %v767 = vxor.u32 %v766, 2147483648
  %v768 = vmul.f32 %v767, 1.442695
  %v769 = vpow.pop %v768
  %v770 = vadd.f32 %v769, 1.0
  %v771 = vrcp.pop %v770
  %v772 = vmul.f32 1.0, %v771
  %v773 = vtanh.pop %v766
  %v774 = vmul.f32 %v772, %v682
  %776 = vrot.lane.b32.xlu0 %v773, 64
  %v777 = vpop.permute.xlu0 %776
  %v779 = vmul.f32 %v772, %v777
  %781 = vrot.lane.b32.xlu0 %v779, 32
  %v782 = vpop.permute.xlu0 %781
  %v784 = vadd.f32 %v774, %v782
  %v785 = vtanh.pop %v784
  %787 = vrot.lane.b32.xlu0 %v785, 64
  %v788 = vpop.permute.xlu0 %787
  %v790 = vmul.f32 %v772, %v788
  %s791 = scalar_lea.vmem [#allocation2], 48
  %v792 = vld [vmem:[%s791] sm:$0xff]
  %794 = vrot.lane.b32.xlu0 %v790, 32
  %v795 = vpop.permute.xlu0 %794
  %v796 = vsel %vm182, %v795, 0
  %798 = vmatprep.subr.mxu0 0.0
  %799 = vmatpush1.msra.mxu0 0.0
  %800 = vmatprep.subr.mxu0 0.0
  %801 = vmatpush1.msra.mxu0 0.0
  %802 = vmatprep.subr.mxu0 0.0
  %803 = vmatpush1.msra.mxu0 0.0
  %804 = vmatprep.subr.mxu0 0.0
  %805 = vmatpush1.msra.mxu0 0.0
  %806 = vmatprep.subr.mxu0 0.0
  %807 = vmatpush1.msra.mxu0 0.0
  %808 = vmatprep.subr.mxu0 0.0
  %809 = vmatpush1.msra.mxu0 0.0
  %810 = vmatprep.subr.mxu0 0.0
  %811 = vmatpush1.msra.mxu0 0.0
  %812 = vmatprep.subr.mxu0 0.0
  %813 = vmatpush1.msra.mxu0 0.0
  %814 = vmatprep.subr.mxu0 0.0
  %815 = vmatpush1.msra.mxu0 0.0
  %816 = vmatprep.subr.mxu0 0.0
  %817 = vmatpush1.msra.mxu0 0.0
  %818 = vmatprep.subr.mxu0 0.0
  %819 = vmatpush1.msra.mxu0 0.0
  %820 = vmatprep.subr.mxu0 0.0
  %821 = vmatpush1.msra.mxu0 0.0
  %822 = vmatprep.subr.mxu0 0.0
  %823 = vmatpush1.msra.mxu0 %v180
  %824 = vmatprep.subr.mxu0 0.0
  %825 = vmatpush1.msra.mxu0 %v179
  %826 = vmatprep.subr.mxu0 0.0
  %827 = vmatpush1.msra.mxu0 %v178
  %828 = vmatprep.subr.mxu0 0.0
  %829 = vmatpush1.msra.mxu0 %v177
  %830 = vmatprep.subr.mxu0 0.0
  %831 = vmatpush2.msra.mxu0 0.0
  %832 = vmatprep.subr.mxu0 0.0
  %833 = vmatpush2.msra.mxu0 0.0
  %834 = vmatprep.subr.mxu0 0.0
  %835 = vmatpush2.msra.mxu0 0.0
  %836 = vmatprep.subr.mxu0 0.0
  %837 = vmatpush2.msra.mxu0 0.0
  %838 = vmatprep.subr.mxu0 0.0
  %839 = vmatpush2.msra.mxu0 0.0
  %840 = vmatprep.subr.mxu0 0.0
  %841 = vmatpush2.msra.mxu0 0.0
  %842 = vmatprep.subr.mxu0 0.0
  %843 = vmatpush2.msra.mxu0 0.0
  %844 = vmatprep.subr.mxu0 0.0
  %845 = vmatpush2.msra.mxu0 0.0
  %846 = vmatprep.subr.mxu0 0.0
  %847 = vmatpush2.msra.mxu0 0.0
  %848 = vmatprep.subr.mxu0 0.0
  %849 = vmatpush2.msra.mxu0 0.0
  %850 = vmatprep.subr.mxu0 0.0
  %851 = vmatpush2.msra.mxu0 0.0
  %852 = vmatprep.subr.mxu0 0.0
  %853 = vmatpush2.msra.mxu0 0.0
  %854 = vmatprep.subr.mxu0 0.0
  %855 = vmatpush2.msra.mxu0 0.0
  %856 = vmatprep.subr.mxu0 0.0
  %857 = vmatpush2.msra.mxu0 0.0
  %858 = vmatprep.subr.mxu0 0.0
  %859 = vmatpush2.msra.mxu0 0.0
  %860 = vmatprep.subr.mxu0 0.0
  %861 = vmatpush2.msra.mxu0 0.0
  %862 = vmatprep.mubr.f32.mxu0 0.0
  %863 = vmatmul.mubr.f32.gmra.mxu0 %v796
  %v864 = vpop.f32.mrf.mxu0
  %v865 = vadd.f32 0.0, %v864
  %v866 = vpop.f32.mrf.mxu0
  %867 = vdwg.mxu0
  %v868 = vadd.f32 %v792, %v865
  %v869 = vxor.u32 %v868, 2147483648
  %v870 = vmul.f32 %v869, 1.442695
  %v871 = vpow.pop %v870
  %v872 = vadd.f32 %v871, 1.0
  %v873 = vrcp.pop %v872
  %v874 = vmul.f32 1.0, %v873
  %v875 = vtanh.pop %v868
  %v876 = vmul.f32 %v874, %v784
  %878 = vrot.lane.b32.xlu0 %v875, 64
  %v879 = vpop.permute.xlu0 %878
  %v881 = vmul.f32 %v874, %v879
  %883 = vrot.lane.b32.xlu0 %v881, 32
  %v884 = vpop.permute.xlu0 %883
  %v886 = vadd.f32 %v876, %v884
  %v887 = vtanh.pop %v886
  %889 = vrot.lane.b32.xlu0 %v887, 64
  %v890 = vpop.permute.xlu0 %889
  %v892 = vmul.f32 %v874, %v890
  %s893 = scalar_lea.vmem [#allocation2], 56
  %v894 = vld [vmem:[%s893] sm:$0xff]
  %896 = vrot.lane.b32.xlu0 %v892, 32
  %v897 = vpop.permute.xlu0 %896
  %v898 = vsel %vm182, %v897, 0
  %900 = vmatprep.subr.mxu0 0.0
  %901 = vmatpush1.msra.mxu0 0.0
  %902 = vmatprep.subr.mxu0 0.0
  %903 = vmatpush1.msra.mxu0 0.0
  %904 = vmatprep.subr.mxu0 0.0
  %905 = vmatpush1.msra.mxu0 0.0
  %906 = vmatprep.subr.mxu0 0.0
  %907 = vmatpush1.msra.mxu0 0.0
  %908 = vmatprep.subr.mxu0 0.0
  %909 = vmatpush1.msra.mxu0 0.0
  %910 = vmatprep.subr.mxu0 0.0
  %911 = vmatpush1.msra.mxu0 0.0
  %912 = vmatprep.subr.mxu0 0.0
  %913 = vmatpush1.msra.mxu0 0.0
  %914 = vmatprep.subr.mxu0 0.0
  %915 = vmatpush1.msra.mxu0 0.0
  %916 = vmatprep.subr.mxu0 0.0
  %917 = vmatpush1.msra.mxu0 0.0
  %918 = vmatprep.subr.mxu0 0.0
  %919 = vmatpush1.msra.mxu0 0.0
  %920 = vmatprep.subr.mxu0 0.0
  %921 = vmatpush1.msra.mxu0 0.0
  %922 = vmatprep.subr.mxu0 0.0
  %923 = vmatpush1.msra.mxu0 0.0
  %924 = vmatprep.subr.mxu0 0.0
  %925 = vmatpush1.msra.mxu0 %v180
  %926 = vmatprep.subr.mxu0 0.0
  %927 = vmatpush1.msra.mxu0 %v179
  %928 = vmatprep.subr.mxu0 0.0
  %929 = vmatpush1.msra.mxu0 %v178
  %930 = vmatprep.subr.mxu0 0.0
  %931 = vmatpush1.msra.mxu0 %v177
  %932 = vmatprep.subr.mxu0 0.0
  %933 = vmatpush2.msra.mxu0 0.0
  %934 = vmatprep.subr.mxu0 0.0
  %935 = vmatpush2.msra.mxu0 0.0
  %936 = vmatprep.subr.mxu0 0.0
  %937 = vmatpush2.msra.mxu0 0.0
  %938 = vmatprep.subr.mxu0 0.0
  %939 = vmatpush2.msra.mxu0 0.0
  %940 = vmatprep.subr.mxu0 0.0
  %941 = vmatpush2.msra.mxu0 0.0
  %942 = vmatprep.subr.mxu0 0.0
  %943 = vmatpush2.msra.mxu0 0.0
  %944 = vmatprep.subr.mxu0 0.0
  %945 = vmatpush2.msra.mxu0 0.0
  %946 = vmatprep.subr.mxu0 0.0
  %947 = vmatpush2.msra.mxu0 0.0
  %948 = vmatprep.subr.mxu0 0.0
  %949 = vmatpush2.msra.mxu0 0.0
  %950 = vmatprep.subr.mxu0 0.0
  %951 = vmatpush2.msra.mxu0 0.0
  %952 = vmatprep.subr.mxu0 0.0
  %953 = vmatpush2.msra.mxu0 0.0
  %954 = vmatprep.subr.mxu0 0.0
  %955 = vmatpush2.msra.mxu0 0.0
  %956 = vmatprep.subr.mxu0 0.0
  %957 = vmatpush2.msra.mxu0 0.0
  %958 = vmatprep.subr.mxu0 0.0
  %959 = vmatpush2.msra.mxu0 0.0
  %960 = vmatprep.subr.mxu0 0.0
  %961 = vmatpush2.msra.mxu0 0.0
  %962 = vmatprep.subr.mxu0 0.0
  %963 = vmatpush2.msra.mxu0 0.0
  %964 = vmatprep.mubr.f32.mxu0 0.0
  %965 = vmatmul.mubr.f32.gmra.mxu0 %v898
  %v966 = vpop.f32.mrf.mxu0
  %v967 = vadd.f32 0.0, %v966
  %v968 = vpop.f32.mrf.mxu0
  %969 = vdwg.mxu0
  %v970 = vadd.f32 %v894, %v967
  %v971 = vxor.u32 %v970, 2147483648
  %v972 = vmul.f32 %v971, 1.442695
  %v973 = vpow.pop %v972
  %v974 = vadd.f32 %v973, 1.0
  %v975 = vrcp.pop %v974
  %v976 = vmul.f32 1.0, %v975
  %v977 = vtanh.pop %v970
  %v978 = vmul.f32 %v976, %v886
  %980 = vrot.lane.b32.xlu0 %v977, 64
  %v981 = vpop.permute.xlu0 %980
  %v983 = vmul.f32 %v976, %v981
  %985 = vrot.lane.b32.xlu0 %v983, 32
  %v986 = vpop.permute.xlu0 %985
  %v988 = vadd.f32 %v978, %v986
  %v989 = vtanh.pop %v988
  %991 = vrot.lane.b32.xlu0 %v989, 64
  %v992 = vpop.permute.xlu0 %991
  %v994 = vmul.f32 %v976, %v992
  %v995 = vld [vmem:[%s4] sm:$0xff]
  %v996 = vld [vmem:[%s4 + $0x8] sm:$0xff]
  %v997 = vld [vmem:[%s4 + $0x10] sm:$0xff]
  %v998 = vld [vmem:[%s4 + $0x18] sm:$0xff]
  %v999 = vld [vmem:[%s5] sm:$0x1]
  %v1001 = vlaneseq
  %v1002 = vshrl.u32 %v1001, 7
  %v1003 = vsub.s32 0, %v1002
  %v1004 = vrot.slane %v999, %v1003
  %1007 = vrot.lane.b32.xlu0 %v994, 32
  %v1008 = vpop.permute.xlu0 %1007
  %v1009 = vsel %vm182, %v1008, 0
  %1011 = vmatprep.subr.mxu0 0.0
  %1012 = vmatpush1.msra.mxu0 0.0
  %1013 = vmatprep.subr.mxu0 0.0
  %1014 = vmatpush1.msra.mxu0 0.0
  %1015 = vmatprep.subr.mxu0 0.0
  %1016 = vmatpush1.msra.mxu0 0.0
  %1017 = vmatprep.subr.mxu0 0.0
  %1018 = vmatpush1.msra.mxu0 0.0
  %1019 = vmatprep.subr.mxu0 0.0
  %1020 = vmatpush1.msra.mxu0 0.0
  %1021 = vmatprep.subr.mxu0 0.0
  %1022 = vmatpush1.msra.mxu0 0.0
  %1023 = vmatprep.subr.mxu0 0.0
  %1024 = vmatpush1.msra.mxu0 0.0
  %1025 = vmatprep.subr.mxu0 0.0
  %1026 = vmatpush1.msra.mxu0 0.0
  %1027 = vmatprep.subr.mxu0 0.0
  %1028 = vmatpush1.msra.mxu0 0.0
  %1029 = vmatprep.subr.mxu0 0.0
  %1030 = vmatpush1.msra.mxu0 0.0
  %1031 = vmatprep.subr.mxu0 0.0
  %1032 = vmatpush1.msra.mxu0 0.0
  %1033 = vmatprep.subr.mxu0 0.0
  %1034 = vmatpush1.msra.mxu0 0.0
  %1035 = vmatprep.subr.mxu0 0.0
  %1036 = vmatpush1.msra.mxu0 %v998
  %1037 = vmatprep.subr.mxu0 0.0
  %1038 = vmatpush1.msra.mxu0 %v997
  %1039 = vmatprep.subr.mxu0 0.0
  %1040 = vmatpush1.msra.mxu0 %v996
  %1041 = vmatprep.subr.mxu0 0.0
  %1042 = vmatpush1.msra.mxu0 %v995
  %1043 = vmatprep.subr.mxu0 0.0
  %1044 = vmatpush2.msra.mxu0 0.0
  %1045 = vmatprep.subr.mxu0 0.0
  %1046 = vmatpush2.msra.mxu0 0.0
  %1047 = vmatprep.subr.mxu0 0.0
  %1048 = vmatpush2.msra.mxu0 0.0
  %1049 = vmatprep.subr.mxu0 0.0
  %1050 = vmatpush2.msra.mxu0 0.0
  %1051 = vmatprep.subr.mxu0 0.0
  %1052 = vmatpush2.msra.mxu0 0.0
  %1053 = vmatprep.subr.mxu0 0.0
  %1054 = vmatpush2.msra.mxu0 0.0
  %1055 = vmatprep.subr.mxu0 0.0
  %1056 = vmatpush2.msra.mxu0 0.0
  %1057 = vmatprep.subr.mxu0 0.0
  %1058 = vmatpush2.msra.mxu0 0.0
  %1059 = vmatprep.subr.mxu0 0.0
  %1060 = vmatpush2.msra.mxu0 0.0
  %1061 = vmatprep.subr.mxu0 0.0
  %1062 = vmatpush2.msra.mxu0 0.0
  %1063 = vmatprep.subr.mxu0 0.0
  %1064 = vmatpush2.msra.mxu0 0.0
  %1065 = vmatprep.subr.mxu0 0.0
  %1066 = vmatpush2.msra.mxu0 0.0
  %1067 = vmatprep.subr.mxu0 0.0
  %1068 = vmatpush2.msra.mxu0 0.0
  %1069 = vmatprep.subr.mxu0 0.0
  %1070 = vmatpush2.msra.mxu0 0.0
  %1071 = vmatprep.subr.mxu0 0.0
  %1072 = vmatpush2.msra.mxu0 0.0
  %1073 = vmatprep.subr.mxu0 0.0
  %1074 = vmatpush2.msra.mxu0 0.0
  %1075 = vmatprep.mubr.f32.mxu0 0.0
  %1076 = vmatmul.mubr.f32.gmra.mxu0 %v1009
  %v1077 = vpop.f32.mrf.mxu0
  %v1078 = vadd.f32 %v1004, %v1077
  %v1079 = vpop.f32.mrf.mxu0
  %1080 = vdwg.mxu0
  %1081 = vst [vmem:[%s6] sm:$0xff] %v1078
  // Predicated region
  $region26: #{rnn_model_forward.1} parent=0 // pred_check
    _
  $region27: #{rnn_model_forward.1} parent=0 // pred_check_branch
    %1083 = sbr.rel (0) target = $region29
  $region28: #{rnn_model_forward.1} parent=0 // pred_region
    _
  $region29: #{rnn_model_forward.1} parent=0 // pred_fallthru
    _
  // Predicated region
  $region30: #{rnn_model_forward.1} parent=0 // pred_check
    _
  $region31: #{rnn_model_forward.1} parent=0 // pred_check_branch
    %1085 = sbr.rel (0) target = $region33
  $region32: #{rnn_model_forward.1} parent=0 // pred_region
    _
  $region33: #{rnn_model_forward.1} parent=0 // pred_fallthru
    _

</llo_original>
